<compile_context>
chip_gen: v7x
topology: tpu7x:2x2x1
jax: 0.10.0
libtpu: 0.0.40
codegen_flags: <defaults>
</compile_context>

<pallas_src>
import functools
import math

import jax
import jax.numpy as jnp
from jax import lax
from jax.experimental import pallas as pl
from jax.experimental.pallas import tpu as pltpu


def _vmem_limit_bytes():
    # Generation-aware scoped-VMEM cap: ~3/4 of physical per-core VMEM, capped at
    # 100 MiB (v5e/v6e have 128 MiB per core, v7x only 64 MiB).
    try:
        cap = int(pltpu.get_tpu_info().vmem_capacity_bytes)
        return int(min(cap * 3 // 4, 100 * 1024 * 1024))
    except Exception:
        return 48 * 1024 * 1024  # conservative fallback that also fits v7x


def _row_tile(n):
    # Largest power-of-two tile dividing n while leaving >= 2 grid steps so both
    # v7x TensorCores get work under the "parallel" grid axis.
    for cand in (1024, 512, 256, 128, 64, 32, 16, 8):
        if n % cand == 0 and n // cand >= 2:
            return cand
    for cand in (1024, 512, 256, 128, 64, 32, 16, 8):
        if n % cand == 0:
            return cand
    return n


def _layer_norm(x, gamma, beta, eps):
    # torch.nn.LayerNorm: biased variance, f32 statistics.
    mean = jnp.mean(x, axis=-1, keepdims=True)
    var = jnp.mean((x - mean) ** 2, axis=-1, keepdims=True)
    return (x - mean) * lax.rsqrt(var + eps) * gamma + beta


# --------------------------------------------------------------------------- #
# Kernel 1: Q/K/V projections, row-tiled over B*T (folds batch into MXU M).    #
# --------------------------------------------------------------------------- #
def qkv_kernel(x_ref, wq_ref, wk_ref, wv_ref, bq_ref, bk_ref, bv_ref,
               q_ref, k_ref, v_ref):
    x = x_ref[...]                                                # (TM, C) bf16 (pre-cast)
    q_ref[...] = (jnp.dot(x, wq_ref[...], preferred_element_type=jnp.float32)
                  + bq_ref[...]).astype(q_ref.dtype)
    k_ref[...] = (jnp.dot(x, wk_ref[...], preferred_element_type=jnp.float32)
                  + bk_ref[...]).astype(k_ref.dtype)
    v_ref[...] = (jnp.dot(x, wv_ref[...], preferred_element_type=jnp.float32)
                  + bv_ref[...]).astype(v_ref.dtype)


# --------------------------------------------------------------------------- #
# Kernel 2: masked softmax attention, all H heads of one batch per grid step.  #
# --------------------------------------------------------------------------- #
def attention_kernel(q_ref, k_ref, v_ref, mask_ref, ctx_ref, attnw_ref):
    q = q_ref[0]                                                  # (H, T, D) bf16, pre-scaled
    k = k_ref[0]                                                  # (H, T, D) bf16
    v = v_ref[0]                                                  # (H, T, D) bf16
    keep = (mask_ref[0] != 0)[None, :, :]                         # (1, T, T) bool, int8 compare

    # scores = q @ k^T per head (batched over H, contraction over head_dim).
    scores = jnp.einsum("hqd,hkd->hqk", q, k,
                        preferred_element_type=jnp.float32)       # (H, T, T) f32
    scores = jnp.where(keep, scores, -1e18)                       # python literal: no captured consts

    m = jnp.max(scores, axis=-1, keepdims=True)
    e = jnp.exp(scores - m)
    s = jnp.sum(e, axis=-1, keepdims=True)
    w = e / s                                                     # exact normalization (returned)
    w = jnp.where(keep, w, 0.0)                                   # masked_softmax: zero masked cols

    attnw_ref[0] = w.astype(attnw_ref.dtype)
    ctx = jnp.einsum("hqk,hkd->hqd", w.astype(v.dtype), v,
                     preferred_element_type=jnp.float32)          # (H, T, D)
    ctx_ref[0] = ctx.astype(ctx_ref.dtype)


# --------------------------------------------------------------------------- #
# Kernel 3: attention proj + residual + LN + FFN + residual + LN, row-tiled.   #
# --------------------------------------------------------------------------- #
def output_kernel(ctx_ref, res_ref, wproj_ref, bproj_ref,
                  ln1g_ref, ln1b_ref, w1_ref, b1_ref, w2_ref, b2_ref,
                  ln2g_ref, ln2b_ref, out_ref, *, eps):
    ctx = ctx_ref[...]                                            # (TM, C) bf16
    res = res_ref[...]                                            # (TM, C) f32

    proj = jnp.dot(ctx, wproj_ref[...], preferred_element_type=jnp.float32) + bproj_ref[...]
    y = proj + res                                                # dropout disabled (eval)
    y = _layer_norm(y, ln1g_ref[...], ln1b_ref[...], eps)         # f32

    h = jnp.dot(y.astype(jnp.bfloat16), w1_ref[...],
                preferred_element_type=jnp.float32) + b1_ref[...]
    h = jnp.maximum(h, 0.0)                                       # relu
    z = jnp.dot(h.astype(jnp.bfloat16), w2_ref[...],
                preferred_element_type=jnp.float32) + b2_ref[...]
    z = z + y
    out_ref[...] = _layer_norm(z, ln2g_ref[...], ln2b_ref[...], eps).astype(out_ref.dtype)


# --------------------------------------------------------------------------- #
# Wrapper                                                                      #
# --------------------------------------------------------------------------- #
def transformer_encoder_layer(data, attn_mask, params, *, num_heads,
                              eps=1e-12, attn_weight_dtype=jnp.float32):
    # eps default matches the module's layer_norm_eps=1e-12 default.
    B, T, C = data.shape
    H = num_heads
    D = C // H
    hidden = params["w1"].shape[1]
    N = B * T
    TM = _row_tile(N)

    f32, bf16 = jnp.float32, jnp.bfloat16
    cparams = pltpu.CompilerParams(
        dimension_semantics=("parallel",), vmem_limit_bytes=_vmem_limit_bytes())

    # Split the fused QKV weight wrapper-side (one-time) and fold the
    # 1/sqrt(head_dim) query scaling into the Q projection (same math).
    scale = 1.0 / math.sqrt(D)
    w_q = (params["w_qkv"][:, 0 * C:1 * C] * scale).astype(bf16)
    w_k = params["w_qkv"][:, 1 * C:2 * C].astype(bf16)
    w_v = params["w_qkv"][:, 2 * C:3 * C].astype(bf16)
    b_q = params["b_qkv"][:, 0 * C:1 * C] * scale
    b_k = params["b_qkv"][:, 1 * C:2 * C]
    b_v = params["b_qkv"][:, 2 * C:3 * C]

    w_proj_bf = params["w_proj"].astype(bf16)
    w1_bf = params["w1"].astype(bf16)
    w2_bf = params["w2"].astype(bf16)

    x2d = data.reshape(N, C)                 # f32, residual path for kernel 3
    x2d_bf = x2d.astype(bf16)                # pre-cast once: halves kernel-1 input DMA
    mask_i8 = (attn_mask > 0).astype(jnp.int8)

    # ---- 1) Q/K/V projections --------------------------------------------- #
    row_spec = pl.BlockSpec((TM, C), lambda i: (i, 0))
    const_w = pl.BlockSpec((C, C), lambda i: (0, 0))
    const_b = pl.BlockSpec((1, C), lambda i: (0, 0))
    q2d, k2d, v2d = pl.pallas_call(
        qkv_kernel,
        out_shape=tuple(jax.ShapeDtypeStruct((N, C), bf16) for _ in range(3)),
        grid_spec=pltpu.PrefetchScalarGridSpec(
            num_scalar_prefetch=0,
            grid=(N // TM,),
            in_specs=[row_spec, const_w, const_w, const_w, const_b, const_b, const_b],
            out_specs=[row_spec, row_spec, row_spec],
        ),
        compiler_params=cparams,
    )(x2d_bf, w_q, w_k, w_v, b_q, b_k, b_v)

    # Head split (wrapper-side layout plumbing): (N, C) -> (B, H, T, D).
    # TODO(synk): eliminate these transposes via per-head BlockSpecs once D%128==0.
    def to_heads(a):
        return a.reshape(B, T, H, D).transpose(0, 2, 1, 3)

    q, k, v = to_heads(q2d), to_heads(k2d), to_heads(v2d)

    # ---- 2) per-batch attention over all heads ----------------------------- #
    head_spec = pl.BlockSpec((1, H, T, D), lambda b: (b, 0, 0, 0))
    ctx, attn_w = pl.pallas_call(
        attention_kernel,
        out_shape=(jax.ShapeDtypeStruct((B, H, T, D), bf16),
                   jax.ShapeDtypeStruct((B, H, T, T), attn_weight_dtype)),
        grid_spec=pltpu.PrefetchScalarGridSpec(
            num_scalar_prefetch=0,
            grid=(B,),
            in_specs=[
                head_spec,  # q
                head_spec,  # k
                head_spec,  # v
                pl.BlockSpec((1, T, T), lambda b: (b, 0, 0)),      # int8 mask
            ],
            out_specs=[
                head_spec,                                          # ctx
                pl.BlockSpec((1, H, T, T), lambda b: (b, 0, 0, 0)), # attn weights
            ],
        ),
        compiler_params=cparams,
    )(q, k, v, mask_i8)

    # Merge heads back: (B, H, T, D) -> (B*T, C).
    ctx2d = ctx.transpose(0, 2, 1, 3).reshape(N, C)

    # ---- 3) proj + residual + LN + FFN + residual + LN --------------------- #
    out2d = pl.pallas_call(
        functools.partial(output_kernel, eps=eps),
        out_shape=jax.ShapeDtypeStruct((N, C), f32),
        grid_spec=pltpu.PrefetchScalarGridSpec(
            num_scalar_prefetch=0,
            grid=(N // TM,),
            in_specs=[
                pl.BlockSpec((TM, C), lambda i: (i, 0)),        # ctx
                pl.BlockSpec((TM, C), lambda i: (i, 0)),        # residual (original data)
                pl.BlockSpec((C, C), lambda i: (0, 0)),         # w_proj
                pl.BlockSpec((1, C), lambda i: (0, 0)),         # b_proj
                pl.BlockSpec((1, C), lambda i: (0, 0)),         # ln1 gamma
                pl.BlockSpec((1, C), lambda i: (0, 0)),         # ln1 beta
                pl.BlockSpec((C, hidden), lambda i: (0, 0)),    # w1
                pl.BlockSpec((1, hidden), lambda i: (0, 0)),    # b1
                pl.BlockSpec((hidden, C), lambda i: (0, 0)),    # w2
                pl.BlockSpec((1, C), lambda i: (0, 0)),         # b2
                pl.BlockSpec((1, C), lambda i: (0, 0)),         # ln2 gamma
                pl.BlockSpec((1, C), lambda i: (0, 0)),         # ln2 beta
            ],
            out_specs=pl.BlockSpec((TM, C), lambda i: (i, 0)),
        ),
        compiler_params=cparams,
    )(ctx2d, x2d, w_proj_bf, params["b_proj"],
      params["ln1_g"], params["ln1_b"],
      w1_bf, params["b1"], w2_bf, params["b2"],
      params["ln2_g"], params["ln2_b"])

    return out2d.reshape(B, T, C), attn_w


# --------------------------------------------------------------------------- #
# Pure-JAX f32 reference (for a loose numerical check).                        #
# --------------------------------------------------------------------------- #
def _reference(data, attn_mask, params, num_heads, eps):
    B, T, C = data.shape
    D = C // num_heads
    qkv = data @ params["w_qkv"] + params["b_qkv"]
    q, k, v = jnp.split(qkv, 3, axis=-1)
    q = q.reshape(B, T, num_heads, D).transpose(0, 2, 1, 3)
    k = k.reshape(B, T, num_heads, D).transpose(0, 2, 1, 3)
    v = v.reshape(B, T, num_heads, D).transpose(0, 2, 1, 3)
    scores = jnp.einsum("bhqd,bhkd->bhqk", q, k) / jnp.sqrt(jnp.float32(D))
    keep = (attn_mask > 0)[:, None, :, :]
    scores = jnp.where(keep, scores, -1e18)
    w = jax.nn.softmax(scores, axis=-1)
    w = jnp.where(keep, w, 0.0)
    ctx = jnp.einsum("bhqk,bhkd->bhqd", w, v).transpose(0, 2, 1, 3).reshape(B, T, C)

    def ln(x, g, b):
        m = x.mean(-1, keepdims=True)
        var = ((x - m) ** 2).mean(-1, keepdims=True)
        return (x - m) * lax.rsqrt(var + eps) * g + b

    y = ln(ctx @ params["w_proj"] + params["b_proj"] + data,
           params["ln1_g"], params["ln1_b"])
    h = jnp.maximum(y @ params["w1"] + params["b1"], 0.0)
    z = ln(h @ params["w2"] + params["b2"] + y, params["ln2_g"], params["ln2_b"])
    return z, w


if __name__ == "__main__":
    B, T, C, H, HID = 2, 8, 32, 4, 64  # units=32, num_heads=4, hidden_size=64
    key = jax.random.PRNGKey(0)
    ks = jax.random.split(key, 10)

    def init(k, shape, scale=0.02):
        return jax.random.normal(k, shape, jnp.float32) * scale

    params = {
        "w_qkv": init(ks[0], (C, 3 * C)),
        "b_qkv": init(ks[1], (1, 3 * C)),
        "w_proj": init(ks[2], (C, C)),
        "b_proj": init(ks[3], (1, C)),
        "ln1_g": jnp.ones((1, C), jnp.float32),
        "ln1_b": jnp.zeros((1, C), jnp.float32),
        "w1": init(ks[4], (C, HID)),
        "b1": init(ks[5], (1, HID)),
        "w2": init(ks[6], (HID, C)),
        "b2": init(ks[7], (1, C)),
        "ln2_g": jnp.ones((1, C), jnp.float32),
        "ln2_b": jnp.zeros((1, C), jnp.float32),
    }

    data = jax.random.normal(ks[8], (B, T, C), jnp.float32)
    # all-ones mask except the last two key positions of batch 1 are masked out
    attn_mask = jnp.ones((B, T, T), jnp.float32).at[1, :, -2:].set(0.0)

    out, attn_w = transformer_encoder_layer(data, attn_mask, params, num_heads=H)
    jax.block_until_ready((out, attn_w))

    assert out.shape == (B, T, C) and attn_w.shape == (B, H, T, T)
    assert bool(jnp.all(jnp.isfinite(out))) and bool(jnp.all(jnp.isfinite(attn_w)))
    # attention rows sum to ~1 over the unmasked keys (exact divide -> tight tol)
    assert bool(jnp.allclose(jnp.sum(attn_w, axis=-1), 1.0, atol=1e-3))
    # masked key columns of batch 1 must be exactly zero
    assert bool(jnp.all(attn_w[1, :, :, -2:] == 0.0))
    # loose check against a pure-JAX f32 reference (kernel uses bf16 matmul operands)
    ref_out, ref_w = _reference(data, attn_mask, params, H, 1e-12)
    assert bool(jnp.allclose(out, ref_out, atol=5e-2))
    assert bool(jnp.allclose(attn_w, ref_w, atol=5e-3))
    print("KERNEL_OK")
</pallas_src>

<mosaic_0001>
module attributes {stable_mosaic.version = 11 : i64} {
  func.func @qkv_kernel(%arg0: i32, %arg1: memref<8x32xbf16, #tpu.memory_space<vmem>>, %arg2: memref<32x32xbf16, #tpu.memory_space<vmem>>, %arg3: memref<32x32xbf16, #tpu.memory_space<vmem>>, %arg4: memref<32x32xbf16, #tpu.memory_space<vmem>>, %arg5: memref<1x32xf32, #tpu.memory_space<vmem>>, %arg6: memref<1x32xf32, #tpu.memory_space<vmem>>, %arg7: memref<1x32xf32, #tpu.memory_space<vmem>>, %arg8: memref<8x32xbf16, #tpu.memory_space<vmem>>, %arg9: memref<8x32xbf16, #tpu.memory_space<vmem>>, %arg10: memref<8x32xbf16, #tpu.memory_space<vmem>>) attributes {dimension_semantics = [#tpu.dimension_semantics<parallel>], iteration_bounds = array<i64: 2>, scalar_prefetch = 0 : i64, scratch_operands = 0 : i64, tpu.core_type = #tpu.core_type<tc>, window_params = [{transform_indices = @transform_0, window_bounds = array<i64: 8, 32>}, {pipeline_mode = #tpu.pipeline_mode<synchronous>, transform_indices = @transform_1, window_bounds = array<i64: 32, 32>}, {pipeline_mode = #tpu.pipeline_mode<synchronous>, transform_indices = @transform_2, window_bounds = array<i64: 32, 32>}, {pipeline_mode = #tpu.pipeline_mode<synchronous>, transform_indices = @transform_3, window_bounds = array<i64: 32, 32>}, {pipeline_mode = #tpu.pipeline_mode<synchronous>, transform_indices = @transform_4, window_bounds = array<i64: 1, 32>}, {pipeline_mode = #tpu.pipeline_mode<synchronous>, transform_indices = @transform_5, window_bounds = array<i64: 1, 32>}, {pipeline_mode = #tpu.pipeline_mode<synchronous>, transform_indices = @transform_6, window_bounds = array<i64: 1, 32>}, {transform_indices = @transform_7, window_bounds = array<i64: 8, 32>}, {transform_indices = @transform_8, window_bounds = array<i64: 8, 32>}, {transform_indices = @transform_9, window_bounds = array<i64: 8, 32>}]} {
    %c0 = arith.constant 0 : index
    %c0_0 = arith.constant 0 : index
    %0 = vector.load %arg1[%c0, %c0_0] : memref<8x32xbf16, #tpu.memory_space<vmem>>, vector<8x32xbf16>
    %c0_1 = arith.constant 0 : index
    %c0_2 = arith.constant 0 : index
    %1 = vector.load %arg2[%c0_1, %c0_2] : memref<32x32xbf16, #tpu.memory_space<vmem>>, vector<32x32xbf16>
    %cst = arith.constant dense<0.000000e+00> : vector<8x32xf32>
    %2 = tpu.matmul %0, %1, %cst {dimension_numbers = #tpu.dot_dimension_numbers<[1], [0], [0], [1], [0, 0, 1, 1], [], []>} : vector<8x32xbf16>, vector<32x32xbf16>, vector<8x32xf32> -> vector<8x32xf32>
    %c0_3 = arith.constant 0 : index
    %c0_4 = arith.constant 0 : index
    %3 = vector.load %arg5[%c0_3, %c0_4] : memref<1x32xf32, #tpu.memory_space<vmem>>, vector<1x32xf32>
    %4 = vector.broadcast %3 : vector<1x32xf32> to vector<8x32xf32>
    %5 = arith.addf %2, %4 : vector<8x32xf32>
    %6 = arith.truncf %5 : vector<8x32xf32> to vector<8x32xbf16>
    %c0_5 = arith.constant 0 : index
    %c0_6 = arith.constant 0 : index
    %7 = vector.load %arg8[%c0_5, %c0_6] : memref<8x32xbf16, #tpu.memory_space<vmem>>, vector<8x32xbf16>
    tpu.vector_store %arg8[%c0_5, %c0_6], %6 {strides = array<i32>} : memref<8x32xbf16, #tpu.memory_space<vmem>>, vector<8x32xbf16>,
    %c0_7 = arith.constant 0 : index
    %c0_8 = arith.constant 0 : index
    %8 = vector.load %arg3[%c0_7, %c0_8] : memref<32x32xbf16, #tpu.memory_space<vmem>>, vector<32x32xbf16>
    %cst_9 = arith.constant dense<0.000000e+00> : vector<8x32xf32>
    %9 = tpu.matmul %0, %8, %cst_9 {dimension_numbers = #tpu.dot_dimension_numbers<[1], [0], [0], [1], [0, 0, 1, 1], [], []>} : vector<8x32xbf16>, vector<32x32xbf16>, vector<8x32xf32> -> vector<8x32xf32>
    %c0_10 = arith.constant 0 : index
    %c0_11 = arith.constant 0 : index
    %10 = vector.load %arg6[%c0_10, %c0_11] : memref<1x32xf32, #tpu.memory_space<vmem>>, vector<1x32xf32>
    %11 = vector.broadcast %10 : vector<1x32xf32> to vector<8x32xf32>
    %12 = arith.addf %9, %11 : vector<8x32xf32>
    %13 = arith.truncf %12 : vector<8x32xf32> to vector<8x32xbf16>
    %c0_12 = arith.constant 0 : index
    %c0_13 = arith.constant 0 : index
    %14 = vector.load %arg9[%c0_12, %c0_13] : memref<8x32xbf16, #tpu.memory_space<vmem>>, vector<8x32xbf16>
    tpu.vector_store %arg9[%c0_12, %c0_13], %13 {strides = array<i32>} : memref<8x32xbf16, #tpu.memory_space<vmem>>, vector<8x32xbf16>,
    %c0_14 = arith.constant 0 : index
    %c0_15 = arith.constant 0 : index
    %15 = vector.load %arg4[%c0_14, %c0_15] : memref<32x32xbf16, #tpu.memory_space<vmem>>, vector<32x32xbf16>
    %cst_16 = arith.constant dense<0.000000e+00> : vector<8x32xf32>
    %16 = tpu.matmul %0, %15, %cst_16 {dimension_numbers = #tpu.dot_dimension_numbers<[1], [0], [0], [1], [0, 0, 1, 1], [], []>} : vector<8x32xbf16>, vector<32x32xbf16>, vector<8x32xf32> -> vector<8x32xf32>
    %c0_17 = arith.constant 0 : index
    %c0_18 = arith.constant 0 : index
    %17 = vector.load %arg7[%c0_17, %c0_18] : memref<1x32xf32, #tpu.memory_space<vmem>>, vector<1x32xf32>
    %18 = vector.broadcast %17 : vector<1x32xf32> to vector<8x32xf32>
    %19 = arith.addf %16, %18 : vector<8x32xf32>
    %20 = arith.truncf %19 : vector<8x32xf32> to vector<8x32xbf16>
    %c0_19 = arith.constant 0 : index
    %c0_20 = arith.constant 0 : index
    %21 = vector.load %arg10[%c0_19, %c0_20] : memref<8x32xbf16, #tpu.memory_space<vmem>>, vector<8x32xbf16>
    tpu.vector_store %arg10[%c0_19, %c0_20], %20 {strides = array<i32>} : memref<8x32xbf16, #tpu.memory_space<vmem>>, vector<8x32xbf16>,
    return
  }
  func.func @transform_0(%arg0: i32) -> (i32, i32) {
    %c0_i32 = arith.constant 0 : i32
    %c0_i32_0 = arith.constant 0 : i32
    return %arg0, %c0_i32 : i32, i32
  }
  func.func @transform_1(%arg0: i32) -> (i32, i32) {
    %c0_i32 = arith.constant 0 : i32
    %c0_i32_0 = arith.constant 0 : i32
    %c0_i32_1 = arith.constant 0 : i32
    return %c0_i32, %c0_i32_0 : i32, i32
  }
  func.func @transform_2(%arg0: i32) -> (i32, i32) {
    %c0_i32 = arith.constant 0 : i32
    %c0_i32_0 = arith.constant 0 : i32
    %c0_i32_1 = arith.constant 0 : i32
    return %c0_i32, %c0_i32_0 : i32, i32
  }
  func.func @transform_3(%arg0: i32) -> (i32, i32) {
    %c0_i32 = arith.constant 0 : i32
    %c0_i32_0 = arith.constant 0 : i32
    %c0_i32_1 = arith.constant 0 : i32
    return %c0_i32, %c0_i32_0 : i32, i32
  }
  func.func @transform_4(%arg0: i32) -> (i32, i32) {
    %c0_i32 = arith.constant 0 : i32
    %c0_i32_0 = arith.constant 0 : i32
    %c0_i32_1 = arith.constant 0 : i32
    return %c0_i32, %c0_i32_0 : i32, i32
  }
  func.func @transform_5(%arg0: i32) -> (i32, i32) {
    %c0_i32 = arith.constant 0 : i32
    %c0_i32_0 = arith.constant 0 : i32
    %c0_i32_1 = arith.constant 0 : i32
    return %c0_i32, %c0_i32_0 : i32, i32
  }
  func.func @transform_6(%arg0: i32) -> (i32, i32) {
    %c0_i32 = arith.constant 0 : i32
    %c0_i32_0 = arith.constant 0 : i32
    %c0_i32_1 = arith.constant 0 : i32
    return %c0_i32, %c0_i32_0 : i32, i32
  }
  func.func @transform_7(%arg0: i32) -> (i32, i32) {
    %c0_i32 = arith.constant 0 : i32
    %c0_i32_0 = arith.constant 0 : i32
    return %arg0, %c0_i32 : i32, i32
  }
  func.func @transform_8(%arg0: i32) -> (i32, i32) {
    %c0_i32 = arith.constant 0 : i32
    %c0_i32_0 = arith.constant 0 : i32
    return %arg0, %c0_i32 : i32, i32
  }
  func.func @transform_9(%arg0: i32) -> (i32, i32) {
    %c0_i32 = arith.constant 0 : i32
    %c0_i32_0 = arith.constant 0 : i32
    return %arg0, %c0_i32 : i32, i32
  }
}

</mosaic_0001>

<llo_original>
// kernel: tpu_custom_call.1
$region0: #{tpu_custom_call.1}
  #allocation0 [shape = 'u32[]', space=smem, size = 0x4, offset = 0x4, fixed_abs, tag = 'smem constant byte address 0x4 - core index']
  #allocation1 [shape = 'u32[144,128]{1,0:T(1,128)}', space=vmem, size = 0x12000, scoped, tag = 'internal scratch']
  %s0 = inlined_call_operand.hbm [shape: bf16[16,32], index: 0, kind: input, shape index: {}]
  %s1 = inlined_call_operand.hbm [shape: bf16[32,32], index: 1, kind: input, shape index: {}]
  %s2 = inlined_call_operand.hbm [shape: bf16[32,32], index: 2, kind: input, shape index: {}]
  %s3 = inlined_call_operand.hbm [shape: bf16[32,32], index: 3, kind: input, shape index: {}]
  %s4 = inlined_call_operand.vmem [shape: f32[1,32], index: 4, kind: input, shape index: {}]
  %s5 = inlined_call_operand.vmem [shape: f32[1,32], index: 5, kind: input, shape index: {}]
  %s6 = inlined_call_operand.vmem [shape: f32[1,32], index: 6, kind: input, shape index: {}]
  %s7 = inlined_call_operand.hbm [shape: bf16[16,32], index: 7, kind: output, shape index: {0}]
  %s8 = inlined_call_operand.hbm [shape: bf16[16,32], index: 8, kind: output, shape index: {1}]
  %s9 = inlined_call_operand.hbm [shape: bf16[16,32], index: 9, kind: output, shape index: {2}]
  %10 = xla_tuple %s7, %s8, %s9
  %s11 = sld [smem:[#allocation0]]
  $region93: #{tpu_custom_call.1} parent=0
    _
  %s13 = ssub.s32 1, %s11
  %s14 = scalar_select 0, %s13, %s11
  $region1: #{tpu_custom_call.1} parent=0
    #allocation2 [shape = 'u8[4096]{0}', space=vmem, size = 0x1000, scoped, tag = 'input window, operand 0']
    #allocation3 [shape = 's32[2]{0}', space=sflag, size = 0x8, scoped, tag = 'scoped memory for tpu_custom_call.1']
    #allocation4 [shape = 's32[2]{0}', space=sflag, size = 0x8, scoped, tag = 'scoped memory for tpu_custom_call.1']
    #allocation5 [shape = 'u8[8192]{0}', space=vmem, size = 0x2000, scoped, tag = 'input window, operand 1, single buffered']
    #allocation6 [shape = 's32[1]{0}', space=sflag, size = 0x4, scoped, tag = 'scoped memory for tpu_custom_call.1']
    #allocation7 [shape = 'u8[8192]{0}', space=vmem, size = 0x2000, scoped, tag = 'input window, operand 2, single buffered']
    #allocation8 [shape = 'u8[8192]{0}', space=vmem, size = 0x2000, scoped, tag = 'input window, operand 3, single buffered']
    #allocation9 [shape = 's32[1]{0}', space=sflag, size = 0x4, scoped, tag = 'scoped memory for tpu_custom_call.1']
    #allocation10 [shape = 'u8[4096]{0}', space=vmem, size = 0x1000, scoped, tag = 'output window, operand 0']
    #allocation11 [shape = 'u8[4096]{0}', space=vmem, size = 0x1000, scoped, tag = 'output window, operand 1']
    #allocation12 [shape = 's32[2]{0}', space=sflag, size = 0x8, scoped, tag = 'scoped memory for tpu_custom_call.1']
    #allocation13 [shape = 'u8[4096]{0}', space=vmem, size = 0x1000, scoped, tag = 'output window, operand 2']
    %15 = vsyncpa [#allocation3], 0
    %s16 = scalar_lea.sflag [#allocation3], 1
    %17 = vsyncpa %s16, 0
    %18 = vsyncpa [#allocation6], 0
    %19 = vsyncpa [#allocation9], 0
    %20 = vsyncpa [#allocation4], 0
    %s21 = scalar_lea.sflag [#allocation4], 1
    %22 = vsyncpa %s21, 0
    %23 = vsyncpa [#allocation12], 0
    %s24 = scalar_lea.sflag [#allocation12], 1
    %25 = vsyncpa %s24, 0
    loop: start=0, step=1, limit=4
    $region2: #{tpu_custom_call.1} parent=1 // loop_pre_header
      _
    $region3: #{tpu_custom_call.1} parent=1 // loop_header
      %s27 = sphi 0, %s31
      %p28 = scmp.ge.s32.totalorder %s27, 4
      %s37 = sphi 0, %s39
      %s40 = sphi 0, %s37
      %s41 = sphi 0, %s40
      %s57 = sphi 0, %s41
      %s61 = sphi 0, %s61
      %s63 = sphi 0, %s61
      %s64 = sphi 0, %s63
      %s78 = sphi 0, %s64
      %s82 = sphi 0, %s82
      %s84 = sphi 0, %s82
      %s85 = sphi 0, %s84
      %s99 = sphi 0, %s85
      %s103 = sphi 0, %s103
      %s105 = sphi 0, %s103
      %s106 = sphi 0, %s105
      %s120 = sphi 0, %s106
      %s124 = sphi 0, %s124
      %s126 = sphi 0, %s124
      %s127 = sphi 0, %s126
      %s141 = sphi 0, %s127
      %s145 = sphi 0, %s145
      %s147 = sphi 0, %s145
      %s148 = sphi 0, %s147
      %s162 = sphi 0, %s148
      %s166 = sphi 0, %s166
      %s168 = sphi 0, %s166
      %s169 = sphi 0, %s168
      %s183 = sphi 0, %s169
      %s189 = sphi 0, %s191
      %s192 = sphi 0, %s189
      %s193 = sphi 0, %s192
      %s209 = sphi 0, %s193
      %s215 = sphi 0, %s217
      %s218 = sphi 0, %s215
      %s219 = sphi 0, %s218
      %s235 = sphi 0, %s219
      %s241 = sphi 0, %s243
      %s244 = sphi 0, %s241
      %s245 = sphi 0, %s244
      %s261 = sphi 0, %s245
    $region4: #{tpu_custom_call.1} parent=1 // loop_header_branch
      %30 = sbr.rel (%p28) target = $region8
    $region5: #{tpu_custom_call.1} parent=1 // loop_body
      %s32 = ssub.s32 %s27, 1
      %s33 = ssub.s32 %s27, 2
      %s34 = sadd.s32 %s27, 1
      %s35 = ssub.s32 %s27, %s34
      %p36 = scmp.eq.s32.totalorder %s35, 0
      %s38 = sadd.s32 %s37, 1
      %s39 = scalar_select %p36, %s37, %s38
      %p42 = pneg %p36
      %p43 = scmp.eq.s32.totalorder %s27, 1
      %p44 = por %p42, %p43
      %p45 = scmp.ne.s32.totalorder %s37, %s40
      %p46 = scmp.eq.s32.totalorder %s27, 0
      %p47 = por %p45, %p46
      %p48 = scmp.ne.s32.totalorder %s37, %s40
      %p49 = scmp.eq.s32.totalorder %s32, 1
      %p50 = por %p48, %p49
      %p51 = scmp.ne.s32.totalorder %s40, %s41
      %p52 = scmp.eq.s32.totalorder %s32, 0
      %p53 = por %p51, %p52
      %p54 = scmp.ne.s32.totalorder %s40, %s41
      %p55 = scmp.eq.s32.totalorder %s33, 1
      %p56 = por %p54, %p55
      %p58 = scmp.ne.s32.totalorder %s41, %s57
      %p59 = scmp.eq.s32.totalorder %s33, 0
      %p60 = por %p58, %p59
      %s62 = sadd.s32 %s61, 1
      %p65 = scmp.eq.s32.totalorder %s27, 1
      %p66 = scmp.ne.s32.totalorder %s61, %s63
      %p67 = scmp.eq.s32.totalorder %s27, 0
      %p68 = por %p66, %p67
      %p69 = scmp.ne.s32.totalorder %s61, %s63
      %p70 = scmp.eq.s32.totalorder %s32, 1
      %p71 = por %p69, %p70
      %p72 = scmp.ne.s32.totalorder %s63, %s64
      %p73 = scmp.eq.s32.totalorder %s32, 0
      %p74 = por %p72, %p73
      %p75 = scmp.ne.s32.totalorder %s63, %s64
      %p76 = scmp.eq.s32.totalorder %s33, 1
      %p77 = por %p75, %p76
      %p79 = scmp.ne.s32.totalorder %s64, %s78
      %p80 = scmp.eq.s32.totalorder %s33, 0
      %p81 = por %p79, %p80
      %s83 = sadd.s32 %s82, 1
      %p86 = scmp.eq.s32.totalorder %s27, 1
      %p87 = scmp.ne.s32.totalorder %s82, %s84
      %p88 = scmp.eq.s32.totalorder %s27, 0
      %p89 = por %p87, %p88
      %p90 = scmp.ne.s32.totalorder %s82, %s84
      %p91 = scmp.eq.s32.totalorder %s32, 1
      %p92 = por %p90, %p91
      %p93 = scmp.ne.s32.totalorder %s84, %s85
      %p94 = scmp.eq.s32.totalorder %s32, 0
      %p95 = por %p93, %p94
      %p96 = scmp.ne.s32.totalorder %s84, %s85
      %p97 = scmp.eq.s32.totalorder %s33, 1
      %p98 = por %p96, %p97
      %p100 = scmp.ne.s32.totalorder %s85, %s99
      %p101 = scmp.eq.s32.totalorder %s33, 0
      %p102 = por %p100, %p101
      %s104 = sadd.s32 %s103, 1
      %p107 = scmp.eq.s32.totalorder %s27, 1
      %p108 = scmp.ne.s32.totalorder %s103, %s105
      %p109 = scmp.eq.s32.totalorder %s27, 0
      %p110 = por %p108, %p109
      %p111 = scmp.ne.s32.totalorder %s103, %s105
      %p112 = scmp.eq.s32.totalorder %s32, 1
      %p113 = por %p111, %p112
      %p114 = scmp.ne.s32.totalorder %s105, %s106
      %p115 = scmp.eq.s32.totalorder %s32, 0
      %p116 = por %p114, %p115
      %p117 = scmp.ne.s32.totalorder %s105, %s106
      %p118 = scmp.eq.s32.totalorder %s33, 1
      %p119 = por %p117, %p118
      %p121 = scmp.ne.s32.totalorder %s106, %s120
      %p122 = scmp.eq.s32.totalorder %s33, 0
      %p123 = por %p121, %p122
      %s125 = sadd.s32 %s124, 1
      %p128 = scmp.eq.s32.totalorder %s27, 1
      %p129 = scmp.ne.s32.totalorder %s124, %s126
      %p130 = scmp.eq.s32.totalorder %s27, 0
      %p131 = por %p129, %p130
      %p132 = scmp.ne.s32.totalorder %s124, %s126
      %p133 = scmp.eq.s32.totalorder %s32, 1
      %p134 = por %p132, %p133
      %p135 = scmp.ne.s32.totalorder %s126, %s127
      %p136 = scmp.eq.s32.totalorder %s32, 0
      %p137 = por %p135, %p136
      %p138 = scmp.ne.s32.totalorder %s126, %s127
      %p139 = scmp.eq.s32.totalorder %s33, 1
      %p140 = por %p138, %p139
      %p142 = scmp.ne.s32.totalorder %s127, %s141
      %p143 = scmp.eq.s32.totalorder %s33, 0
      %p144 = por %p142, %p143
      %s146 = sadd.s32 %s145, 1
      %p149 = scmp.eq.s32.totalorder %s27, 1
      %p150 = scmp.ne.s32.totalorder %s145, %s147
      %p151 = scmp.eq.s32.totalorder %s27, 0
      %p152 = por %p150, %p151
      %p153 = scmp.ne.s32.totalorder %s145, %s147
      %p154 = scmp.eq.s32.totalorder %s32, 1
      %p155 = por %p153, %p154
      %p156 = scmp.ne.s32.totalorder %s147, %s148
      %p157 = scmp.eq.s32.totalorder %s32, 0
      %p158 = por %p156, %p157
      %p159 = scmp.ne.s32.totalorder %s147, %s148
      %p160 = scmp.eq.s32.totalorder %s33, 1
      %p161 = por %p159, %p160
      %p163 = scmp.ne.s32.totalorder %s148, %s162
      %p164 = scmp.eq.s32.totalorder %s33, 0
      %p165 = por %p163, %p164
      %s167 = sadd.s32 %s166, 1
      %p170 = scmp.eq.s32.totalorder %s27, 1
      %p171 = scmp.ne.s32.totalorder %s166, %s168
      %p172 = scmp.eq.s32.totalorder %s27, 0
      %p173 = por %p171, %p172
      %p174 = scmp.ne.s32.totalorder %s166, %s168
      %p175 = scmp.eq.s32.totalorder %s32, 1
      %p176 = por %p174, %p175
      %p177 = scmp.ne.s32.totalorder %s168, %s169
      %p178 = scmp.eq.s32.totalorder %s32, 0
      %p179 = por %p177, %p178
      %p180 = scmp.ne.s32.totalorder %s168, %s169
      %p181 = scmp.eq.s32.totalorder %s33, 1
      %p182 = por %p180, %p181
      %p184 = scmp.ne.s32.totalorder %s169, %s183
      %p185 = scmp.eq.s32.totalorder %s33, 0
      %p186 = por %p184, %p185
      %s187 = ssub.s32 %s27, %s34
      %p188 = scmp.eq.s32.totalorder %s187, 0
      %s190 = sadd.s32 %s189, 1
      %s191 = scalar_select %p188, %s189, %s190
      %p194 = pneg %p188
      %p195 = scmp.eq.s32.totalorder %s27, 1
      %p196 = por %p194, %p195
      %p197 = scmp.ne.s32.totalorder %s189, %s192
      %p198 = scmp.eq.s32.totalorder %s27, 0
      %p199 = por %p197, %p198
      %p200 = scmp.ne.s32.totalorder %s189, %s192
      %p201 = scmp.eq.s32.totalorder %s32, 1
      %p202 = por %p200, %p201
      %p203 = scmp.ne.s32.totalorder %s192, %s193
      %p204 = scmp.eq.s32.totalorder %s32, 0
      %p205 = por %p203, %p204
      %p206 = scmp.ne.s32.totalorder %s192, %s193
      %p207 = scmp.eq.s32.totalorder %s33, 1
      %p208 = por %p206, %p207
      %p210 = scmp.ne.s32.totalorder %s193, %s209
      %p211 = scmp.eq.s32.totalorder %s33, 0
      %p212 = por %p210, %p211
      %s213 = ssub.s32 %s27, %s34
      %p214 = scmp.eq.s32.totalorder %s213, 0
      %s216 = sadd.s32 %s215, 1
      %s217 = scalar_select %p214, %s215, %s216
      %p220 = pneg %p214
      %p221 = scmp.eq.s32.totalorder %s27, 1
      %p222 = por %p220, %p221
      %p223 = scmp.ne.s32.totalorder %s215, %s218
      %p224 = scmp.eq.s32.totalorder %s27, 0
      %p225 = por %p223, %p224
      %p226 = scmp.ne.s32.totalorder %s215, %s218
      %p227 = scmp.eq.s32.totalorder %s32, 1
      %p228 = por %p226, %p227
      %p229 = scmp.ne.s32.totalorder %s218, %s219
      %p230 = scmp.eq.s32.totalorder %s32, 0
      %p231 = por %p229, %p230
      %p232 = scmp.ne.s32.totalorder %s218, %s219
      %p233 = scmp.eq.s32.totalorder %s33, 1
      %p234 = por %p232, %p233
      %p236 = scmp.ne.s32.totalorder %s219, %s235
      %p237 = scmp.eq.s32.totalorder %s33, 0
      %p238 = por %p236, %p237
      %s239 = ssub.s32 %s27, %s34
      %p240 = scmp.eq.s32.totalorder %s239, 0
      %s242 = sadd.s32 %s241, 1
      %s243 = scalar_select %p240, %s241, %s242
      %p246 = pneg %p240
      %p247 = scmp.eq.s32.totalorder %s27, 1
      %p248 = por %p246, %p247
      %p249 = scmp.ne.s32.totalorder %s241, %s244
      %p250 = scmp.eq.s32.totalorder %s27, 0
      %p251 = por %p249, %p250
      %p252 = scmp.ne.s32.totalorder %s241, %s244
      %p253 = scmp.eq.s32.totalorder %s32, 1
      %p254 = por %p252, %p253
      %p255 = scmp.ne.s32.totalorder %s244, %s245
      %p256 = scmp.eq.s32.totalorder %s32, 0
      %p257 = por %p255, %p256
      %p258 = scmp.ne.s32.totalorder %s244, %s245
      %p259 = scmp.eq.s32.totalorder %s33, 1
      %p260 = por %p258, %p259
      %p262 = scmp.ne.s32.totalorder %s245, %s261
      %p263 = scmp.eq.s32.totalorder %s33, 0
      %p264 = por %p262, %p263
      %p265 = scmp.le.s32.totalorder 1, %s27
      %p266 = scmp.lt.s32.totalorder %s27, 3
      %p267 = pnand %p265, %p266
      %p268 = pneg %p267
      // Predicated region
      $region9: #{tpu_custom_call.1} parent=5 // pred_check
        _
      $region10: #{tpu_custom_call.1} parent=5 // pred_check_branch
        %270 = sbr.rel (%p267) target = $region12
      $region11: #{tpu_custom_call.1} parent=5 // pred_region
        %s271 = ssub.s32 %s27, 1
        // Predicated region
        $region13: #{tpu_custom_call.1} parent=11 // pred_check
          %p272 = pneg %p74
        $region14: #{tpu_custom_call.1} parent=11 // pred_check_branch
          %274 = sbr.rel (%p272) target = $region16
        $region15: #{tpu_custom_call.1} parent=11 // pred_region
          %s276 = ssub.s32 256, 256
          %277 = vsyncadd [#allocation6], %s276
          %s278 = sshll.u32 [#allocation5], 4
          %s279 = int_to_ptr.vmem [resolvable:$true] %s278
          %284 = dma.hbm_to_vmem [thread:$0]  %s1, 256, %s279, [#allocation6], 64, 64, 4
        $region16: #{tpu_custom_call.1} parent=11 // pred_fallthru
          _
        // Predicated region
        $region17: #{tpu_custom_call.1} parent=11 // pred_check
          %p285 = pneg %p95
        $region18: #{tpu_custom_call.1} parent=11 // pred_check_branch
          %287 = sbr.rel (%p285) target = $region20
        $region19: #{tpu_custom_call.1} parent=11 // pred_region
          %s289 = ssub.s32 256, 256
          %290 = vsyncadd [#allocation6], %s289
          %s291 = sshll.u32 [#allocation7], 4
          %s292 = int_to_ptr.vmem [resolvable:$true] %s291
          %297 = dma.hbm_to_vmem [thread:$0]  %s2, 256, %s292, [#allocation6], 64, 64, 4
        $region20: #{tpu_custom_call.1} parent=11 // pred_fallthru
          _
        // Predicated region
        $region21: #{tpu_custom_call.1} parent=11 // pred_check
          %p298 = pneg %p116
        $region22: #{tpu_custom_call.1} parent=11 // pred_check_branch
          %300 = sbr.rel (%p298) target = $region24
        $region23: #{tpu_custom_call.1} parent=11 // pred_region
          %s302 = ssub.s32 256, 256
          %303 = vsyncadd [#allocation9], %s302
          %s304 = sshll.u32 [#allocation8], 4
          %s305 = int_to_ptr.vmem [resolvable:$true] %s304
          %310 = dma.hbm_to_vmem [thread:$0]  %s3, 256, %s305, [#allocation9], 64, 64, 4
        $region24: #{tpu_custom_call.1} parent=11 // pred_fallthru
          _
        // Predicated region
        $region25: #{tpu_custom_call.1} parent=11 // pred_check
          %p311 = pneg %p137
        $region26: #{tpu_custom_call.1} parent=11 // pred_check_branch
          %313 = sbr.rel (%p311) target = $region28
        $region27: #{tpu_custom_call.1} parent=11 // pred_region
          _
        $region28: #{tpu_custom_call.1} parent=11 // pred_fallthru
          _
        // Predicated region
        $region29: #{tpu_custom_call.1} parent=11 // pred_check
          %p314 = pneg %p158
        $region30: #{tpu_custom_call.1} parent=11 // pred_check_branch
          %316 = sbr.rel (%p314) target = $region32
        $region31: #{tpu_custom_call.1} parent=11 // pred_region
          _
        $region32: #{tpu_custom_call.1} parent=11 // pred_fallthru
          _
        // Predicated region
        $region33: #{tpu_custom_call.1} parent=11 // pred_check
          %p317 = pneg %p179
        $region34: #{tpu_custom_call.1} parent=11 // pred_check_branch
          %319 = sbr.rel (%p317) target = $region36
        $region35: #{tpu_custom_call.1} parent=11 // pred_region
          _
        $region36: #{tpu_custom_call.1} parent=11 // pred_fallthru
          _
      $region12: #{tpu_custom_call.1} parent=5 // pred_fallthru
        _
      %p320 = scmp.lt.s32.totalorder %s27, 2
      // Predicated region
      $region37: #{tpu_custom_call.1} parent=5 // pred_check
        %p321 = pneg %p320
      $region38: #{tpu_custom_call.1} parent=5 // pred_check_branch
        %323 = sbr.rel (%p321) target = $region40
      $region39: #{tpu_custom_call.1} parent=5 // pred_region
        // Predicated region
        $region41: #{tpu_custom_call.1} parent=39 // pred_check
          %p324 = pneg %p47
        $region42: #{tpu_custom_call.1} parent=39 // pred_check_branch
          %326 = sbr.rel (%p324) target = $region44
        $region43: #{tpu_custom_call.1} parent=39 // pred_region
          %s327 = sand.u32 %s37, 1
          %s328 = scalar_lea.sflag [#allocation3], %s327
          %s329 = sand.u32 %s37, 1
          %s330 = smul.addr %s329, 4
          %s331 = scalar_lea.vmem [#allocation2], %s330
          %s333 = ssub.s32 64, 64
          %334 = vsyncadd %s328, %s333
          %s335 = smul.addr %s27, 64
          %s336 = scalar_lea.hbm %s0, %s335
          %s338 = sshll.u32 %s331, 4
          %s339 = int_to_ptr.vmem [resolvable:$true] %s338
          %341 = dma.hbm_to_vmem [thread:$0]  %s336, 64, %s339, %s328
        $region44: #{tpu_custom_call.1} parent=39 // pred_fallthru
          _
      $region40: #{tpu_custom_call.1} parent=5 // pred_fallthru
        _
      %p342 = scmp.le.s32.totalorder 1, %s27
      %p343 = scmp.lt.s32.totalorder %s27, 3
      %p344 = pnand %p342, %p343
      %p345 = pneg %p344
      // Predicated region
      $region45: #{tpu_custom_call.1} parent=5 // pred_check
        _
      $region46: #{tpu_custom_call.1} parent=5 // pred_check_branch
        %347 = sbr.rel (%p344) target = $region48
      $region47: #{tpu_custom_call.1} parent=5 // pred_region
        %s348 = ssub.s32 %s27, 1
        %s349 = sand.u32 %s40, 1
        %s350 = scalar_lea.sflag [#allocation3], %s349
        %s351 = sand.u32 %s40, 1
        %s352 = smul.addr %s351, 4
        %s353 = scalar_lea.vmem [#allocation2], %s352
        // Predicated region
        $region49: #{tpu_custom_call.1} parent=47 // pred_check
          %p354 = pneg %p53
        $region50: #{tpu_custom_call.1} parent=47 // pred_check_branch
          %356 = sbr.rel (%p354) target = $region52
        $region51: #{tpu_custom_call.1} parent=47 // pred_region
          %357 = dma.done %s350, 64
        $region52: #{tpu_custom_call.1} parent=47 // pred_fallthru
          _
        // Predicated region
        $region53: #{tpu_custom_call.1} parent=47 // pred_check
          %p358 = pneg %p74
        $region54: #{tpu_custom_call.1} parent=47 // pred_check_branch
          %360 = sbr.rel (%p358) target = $region56
        $region55: #{tpu_custom_call.1} parent=47 // pred_region
          %361 = dma.done [#allocation6], 256
        $region56: #{tpu_custom_call.1} parent=47 // pred_fallthru
          _
        // Predicated region
        $region57: #{tpu_custom_call.1} parent=47 // pred_check
          %p362 = pneg %p95
        $region58: #{tpu_custom_call.1} parent=47 // pred_check_branch
          %364 = sbr.rel (%p362) target = $region60
        $region59: #{tpu_custom_call.1} parent=47 // pred_region
          %365 = dma.done [#allocation6], 256
        $region60: #{tpu_custom_call.1} parent=47 // pred_fallthru
          _
        // Predicated region
        $region61: #{tpu_custom_call.1} parent=47 // pred_check
          %p366 = pneg %p116
        $region62: #{tpu_custom_call.1} parent=47 // pred_check_branch
          %368 = sbr.rel (%p366) target = $region64
        $region63: #{tpu_custom_call.1} parent=47 // pred_region
          %369 = dma.done [#allocation9], 256
        $region64: #{tpu_custom_call.1} parent=47 // pred_fallthru
          _
        %s370 = sand.u32 %s40, 1
        %s371 = scalar_lea.sflag [#allocation3], %s370
        %s372 = sand.u32 %s40, 1
        %s373 = smul.addr %s372, 4
        %s374 = scalar_lea.vmem [#allocation2], %s373
        %p375 = pneg %p53
        %p376 = pneg %p50
        %p377 = pneg %p74
        %p378 = pneg %p71
        %p379 = pneg %p95
        %p380 = pneg %p92
        %p381 = pneg %p116
        %p382 = pneg %p113
        %p383 = pneg %p137
        %p384 = pneg %p134
        %p385 = pneg %p158
        %p386 = pneg %p155
        %p387 = pneg %p179
        %p388 = pneg %p176
        %p389 = pneg %p205
        %p390 = pneg %p202
        %s391 = sand.u32 %s192, 1
        %s392 = scalar_lea.sflag [#allocation4], %s391
        %s393 = sand.u32 %s192, 1
        %s394 = smul.addr %s393, 4
        %s395 = scalar_lea.vmem [#allocation10], %s394
        %p396 = pneg %p231
        %p397 = pneg %p228
        %s398 = sand.u32 %s32, 1
        %s399 = scalar_lea.sflag [#allocation12], %s398
        %s400 = sand.u32 %s218, 1
        %s401 = smul.addr %s400, 4
        %s402 = scalar_lea.vmem [#allocation11], %s401
        %p403 = pneg %p257
        %p404 = pneg %p254
        %s405 = sand.u32 %s32, 1
        %s406 = scalar_lea.sflag [#allocation12], %s405
        %s407 = sand.u32 %s244, 1
        %s408 = smul.addr %s407, 4
        %s409 = scalar_lea.vmem [#allocation13], %s408
        %v411 = vld [vmem:[%s353] sm:$0xf]
        %v412 = vld [vmem:[#allocation5] sm:$0xf]
        %v413 = vld [vmem:[#allocation5 + $0x4] sm:$0xf]
        %v414 = vld [vmem:[#allocation5 + $0x8] sm:$0xf]
        %v415 = vld [vmem:[#allocation5 + $0xc] sm:$0xf]
        %v416 = vld [vmem:[%s4] sm:$0x1]
        %v418 = vlaneseq
        %v419 = vshrl.u32 %v418, 7
        %v420 = vsub.s32 0, %v419
        %v421 = vrot.slane %v416, %v420
        %v427 = vunpack.c.l.b16 %v412
        %v428 = vunpack.c.l.b16 %v413
        %v429 = vunpack.c.l.b16 %v414
        %v430 = vunpack.c.l.b16 %v415
        %v431 = vpack.c.b16 %v428, %v427
        %v432 = vpack.c.b16 %v430, %v429
        %vm435 = vcmask 261120
        %v437 = vsel %vm435, %v411, 0
        %439 = vmatprep.subr.bf16.mxu0 0
        %440 = vmatpush1.bf16.msra.mxu0 %v431
        %441 = vmatprep.subr.bf16.mxu0 0
        %442 = vmatpush1.bf16.msra.mxu0 %v432
        %443 = vmatprep.subr.bf16.mxu0 0
        %444 = vmatpush1.bf16.msra.mxu0 0
        %445 = vmatprep.subr.bf16.mxu0 0
        %446 = vmatpush1.bf16.msra.mxu0 0
        %447 = vmatprep.subr.bf16.mxu0 0
        %448 = vmatpush1.bf16.msra.mxu0 0
        %449 = vmatprep.subr.bf16.mxu0 0
        %450 = vmatpush1.bf16.msra.mxu0 0
        %451 = vmatprep.subr.bf16.mxu0 0
        %452 = vmatpush1.bf16.msra.mxu0 0
        %453 = vmatprep.subr.bf16.mxu0 0
        %454 = vmatpush1.bf16.msra.mxu0 0
        %455 = vmatprep.subr.bf16.mxu0 0
        %456 = vmatpush1.bf16.msra.mxu0 0
        %457 = vmatprep.subr.bf16.mxu0 0
        %458 = vmatpush1.bf16.msra.mxu0 0
        %459 = vmatprep.subr.bf16.mxu0 0
        %460 = vmatpush1.bf16.msra.mxu0 0
        %461 = vmatprep.subr.bf16.mxu0 0
        %462 = vmatpush1.bf16.msra.mxu0 0
        %463 = vmatprep.subr.bf16.mxu0 0
        %464 = vmatpush1.bf16.msra.mxu0 0
        %465 = vmatprep.subr.bf16.mxu0 0
        %466 = vmatpush1.bf16.msra.mxu0 0
        %467 = vmatprep.subr.bf16.mxu0 0
        %468 = vmatpush1.bf16.msra.mxu0 0
        %469 = vmatprep.subr.bf16.mxu0 0
        %470 = vmatpush1.bf16.msra.mxu0 0
        %471 = vmatprep.mubr.bf16.mxu0 0
        %472 = vmatmul.mubr.bf16.gmra.mrb[0].mxu0 %v437
        %v473 = vpop.f32.mrb[0].mxu0
        %v474 = vadd.f32 %v421, %v473
        %v475 = vpop.f32.mrb[0].mxu0
        %v476 = vpop.f32.mrb[0].mxu0
        %v477 = vpop.f32.mrb[0].mxu0
        %478 = vdwg.mxu0
        %v479 = vpack.c.bf16 %v474, %v474
        %vm480 = vcmask 257024
        %481 = vst.msk [vmem:[%s395] sm:$0xf] %vm480, %v479
        %v482 = vld [vmem:[#allocation7] sm:$0xf]
        %v483 = vld [vmem:[#allocation7 + $0x4] sm:$0xf]
        %v484 = vld [vmem:[#allocation7 + $0x8] sm:$0xf]
        %v485 = vld [vmem:[#allocation7 + $0xc] sm:$0xf]
        %v486 = vld [vmem:[%s5] sm:$0x1]
        %v488 = vlaneseq
        %v489 = vshrl.u32 %v488, 7
        %v490 = vsub.s32 0, %v489
        %v491 = vrot.slane %v486, %v490
        %v497 = vunpack.c.l.b16 %v482
        %v498 = vunpack.c.l.b16 %v483
        %v499 = vunpack.c.l.b16 %v484
        %v500 = vunpack.c.l.b16 %v485
        %v501 = vpack.c.b16 %v498, %v497
        %v502 = vpack.c.b16 %v500, %v499
        %505 = vmatprep.subr.bf16.mxu0 0
        %506 = vmatpush1.bf16.msra.mxu0 %v501
        %507 = vmatprep.subr.bf16.mxu0 0
        %508 = vmatpush1.bf16.msra.mxu0 %v502
        %509 = vmatprep.subr.bf16.mxu0 0
        %510 = vmatpush1.bf16.msra.mxu0 0
        %511 = vmatprep.subr.bf16.mxu0 0
        %512 = vmatpush1.bf16.msra.mxu0 0
        %513 = vmatprep.subr.bf16.mxu0 0
        %514 = vmatpush1.bf16.msra.mxu0 0
        %515 = vmatprep.subr.bf16.mxu0 0
        %516 = vmatpush1.bf16.msra.mxu0 0
        %517 = vmatprep.subr.bf16.mxu0 0
        %518 = vmatpush1.bf16.msra.mxu0 0
        %519 = vmatprep.subr.bf16.mxu0 0
        %520 = vmatpush1.bf16.msra.mxu0 0
        %521 = vmatprep.subr.bf16.mxu0 0
        %522 = vmatpush1.bf16.msra.mxu0 0
        %523 = vmatprep.subr.bf16.mxu0 0
        %524 = vmatpush1.bf16.msra.mxu0 0
        %525 = vmatprep.subr.bf16.mxu0 0
        %526 = vmatpush1.bf16.msra.mxu0 0
        %527 = vmatprep.subr.bf16.mxu0 0
        %528 = vmatpush1.bf16.msra.mxu0 0
        %529 = vmatprep.subr.bf16.mxu0 0
        %530 = vmatpush1.bf16.msra.mxu0 0
        %531 = vmatprep.subr.bf16.mxu0 0
        %532 = vmatpush1.bf16.msra.mxu0 0
        %533 = vmatprep.subr.bf16.mxu0 0
        %534 = vmatpush1.bf16.msra.mxu0 0
        %535 = vmatprep.subr.bf16.mxu0 0
        %536 = vmatpush1.bf16.msra.mxu0 0
        %537 = vmatprep.mubr.bf16.mxu0 0
        %538 = vmatmul.mubr.bf16.gmra.mrb[0].mxu0 %v437
        %v539 = vpop.f32.mrb[0].mxu0
        %v540 = vadd.f32 %v491, %v539
        %v541 = vpop.f32.mrb[0].mxu0
        %v542 = vpop.f32.mrb[0].mxu0
        %v543 = vpop.f32.mrb[0].mxu0
        %544 = vdwg.mxu0
        %v545 = vpack.c.bf16 %v540, %v540
        %546 = vst.msk [vmem:[%s402] sm:$0xf] %vm480, %v545
        %v547 = vld [vmem:[#allocation8] sm:$0xf]
        %v548 = vld [vmem:[#allocation8 + $0x4] sm:$0xf]
        %v549 = vld [vmem:[#allocation8 + $0x8] sm:$0xf]
        %v550 = vld [vmem:[#allocation8 + $0xc] sm:$0xf]
        %v551 = vld [vmem:[%s6] sm:$0x1]
        %v553 = vlaneseq
        %v554 = vshrl.u32 %v553, 7
        %v555 = vsub.s32 0, %v554
        %v556 = vrot.slane %v551, %v555
        %v562 = vunpack.c.l.b16 %v547
        %v563 = vunpack.c.l.b16 %v548
        %v564 = vunpack.c.l.b16 %v549
        %v565 = vunpack.c.l.b16 %v550
        %v566 = vpack.c.b16 %v563, %v562
        %v567 = vpack.c.b16 %v565, %v564
        %570 = vmatprep.subr.bf16.mxu0 0
        %571 = vmatpush1.bf16.msra.mxu0 %v566
        %572 = vmatprep.subr.bf16.mxu0 0
        %573 = vmatpush1.bf16.msra.mxu0 %v567
        %574 = vmatprep.subr.bf16.mxu0 0
        %575 = vmatpush1.bf16.msra.mxu0 0
        %576 = vmatprep.subr.bf16.mxu0 0
        %577 = vmatpush1.bf16.msra.mxu0 0
        %578 = vmatprep.subr.bf16.mxu0 0
        %579 = vmatpush1.bf16.msra.mxu0 0
        %580 = vmatprep.subr.bf16.mxu0 0
        %581 = vmatpush1.bf16.msra.mxu0 0
        %582 = vmatprep.subr.bf16.mxu0 0
        %583 = vmatpush1.bf16.msra.mxu0 0
        %584 = vmatprep.subr.bf16.mxu0 0
        %585 = vmatpush1.bf16.msra.mxu0 0
        %586 = vmatprep.subr.bf16.mxu0 0
        %587 = vmatpush1.bf16.msra.mxu0 0
        %588 = vmatprep.subr.bf16.mxu0 0
        %589 = vmatpush1.bf16.msra.mxu0 0
        %590 = vmatprep.subr.bf16.mxu0 0
        %591 = vmatpush1.bf16.msra.mxu0 0
        %592 = vmatprep.subr.bf16.mxu0 0
        %593 = vmatpush1.bf16.msra.mxu0 0
        %594 = vmatprep.subr.bf16.mxu0 0
        %595 = vmatpush1.bf16.msra.mxu0 0
        %596 = vmatprep.subr.bf16.mxu0 0
        %597 = vmatpush1.bf16.msra.mxu0 0
        %598 = vmatprep.subr.bf16.mxu0 0
        %599 = vmatpush1.bf16.msra.mxu0 0
        %600 = vmatprep.subr.bf16.mxu0 0
        %601 = vmatpush1.bf16.msra.mxu0 0
        %602 = vmatprep.mubr.bf16.mxu0 0
        %603 = vmatmul.mubr.bf16.gmra.mrb[0].mxu0 %v437
        %v604 = vpop.f32.mrb[0].mxu0
        %v605 = vadd.f32 %v556, %v604
        %v606 = vpop.f32.mrb[0].mxu0
        %v607 = vpop.f32.mrb[0].mxu0
        %v608 = vpop.f32.mrb[0].mxu0
        %609 = vdwg.mxu0
        %v610 = vpack.c.bf16 %v605, %v605
        %611 = vst.msk [vmem:[%s409] sm:$0xf] %vm480, %v610
        %s612 = sand.u32 %s192, 1
        %s613 = scalar_lea.sflag [#allocation4], %s612
        %s614 = sand.u32 %s192, 1
        %s615 = smul.addr %s614, 4
        %s616 = scalar_lea.vmem [#allocation10], %s615
        %s617 = sand.u32 %s32, 1
        %s618 = scalar_lea.sflag [#allocation12], %s617
        %s619 = sand.u32 %s218, 1
        %s620 = smul.addr %s619, 4
        %s621 = scalar_lea.vmem [#allocation11], %s620
        %s622 = sand.u32 %s32, 1
        %s623 = scalar_lea.sflag [#allocation12], %s622
        %s624 = sand.u32 %s244, 1
        %s625 = smul.addr %s624, 4
        %s626 = scalar_lea.vmem [#allocation13], %s625
        // Predicated region
        $region65: #{tpu_custom_call.1} parent=47 // pred_check
          %p627 = pneg %p202
        $region66: #{tpu_custom_call.1} parent=47 // pred_check_branch
          %629 = sbr.rel (%p627) target = $region68
        $region67: #{tpu_custom_call.1} parent=47 // pred_region
          %s631 = ssub.s32 64, 64
          %632 = vsyncadd %s613, %s631
          %s633 = smul.addr %s32, 64
          %s634 = scalar_lea.hbm %s7, %s633
          %s636 = sshll.u32 %s616, 4
          %s637 = int_to_ptr.vmem [resolvable:$true] %s636
          %639 = dma.vmem_to_hbm [thread:$0]  %s637, 64, %s634, %s613
        $region68: #{tpu_custom_call.1} parent=47 // pred_fallthru
          _
        // Predicated region
        $region69: #{tpu_custom_call.1} parent=47 // pred_check
          %p640 = pneg %p228
        $region70: #{tpu_custom_call.1} parent=47 // pred_check_branch
          %642 = sbr.rel (%p640) target = $region72
        $region71: #{tpu_custom_call.1} parent=47 // pred_region
          %s644 = ssub.s32 64, 64
          %645 = vsyncadd %s618, %s644
          %s646 = smul.addr %s32, 64
          %s647 = scalar_lea.hbm %s8, %s646
          %s649 = sshll.u32 %s621, 4
          %s650 = int_to_ptr.vmem [resolvable:$true] %s649
          %652 = dma.vmem_to_hbm [thread:$0]  %s650, 64, %s647, %s618
        $region72: #{tpu_custom_call.1} parent=47 // pred_fallthru
          _
        // Predicated region
        $region73: #{tpu_custom_call.1} parent=47 // pred_check
          %p653 = pneg %p254
        $region74: #{tpu_custom_call.1} parent=47 // pred_check_branch
          %655 = sbr.rel (%p653) target = $region76
        $region75: #{tpu_custom_call.1} parent=47 // pred_region
          %s657 = ssub.s32 64, 64
          %658 = vsyncadd %s623, %s657
          %s659 = smul.addr %s32, 64
          %s660 = scalar_lea.hbm %s9, %s659
          %s662 = sshll.u32 %s626, 4
          %s663 = int_to_ptr.vmem [resolvable:$true] %s662
          %665 = dma.vmem_to_hbm [thread:$0]  %s663, 64, %s660, %s623
        $region76: #{tpu_custom_call.1} parent=47 // pred_fallthru
          _
      $region48: #{tpu_custom_call.1} parent=5 // pred_fallthru
        _
      %p666 = scmp.le.s32.totalorder 2, %s27
      // Predicated region
      $region77: #{tpu_custom_call.1} parent=5 // pred_check
        %p667 = pneg %p666
      $region78: #{tpu_custom_call.1} parent=5 // pred_check_branch
        %669 = sbr.rel (%p667) target = $region80
      $region79: #{tpu_custom_call.1} parent=5 // pred_region
        %s670 = ssub.s32 %s27, 2
        // Predicated region
        $region81: #{tpu_custom_call.1} parent=79 // pred_check
          %p671 = pneg %p208
        $region82: #{tpu_custom_call.1} parent=79 // pred_check_branch
          %673 = sbr.rel (%p671) target = $region84
        $region83: #{tpu_custom_call.1} parent=79 // pred_region
          %s674 = sand.u32 %s193, 1
          %s675 = scalar_lea.sflag [#allocation4], %s674
          %s676 = sand.u32 %s193, 1
          %s677 = smul.addr %s676, 4
          %s678 = scalar_lea.vmem [#allocation10], %s677
          %679 = dma.done %s675, 64
        $region84: #{tpu_custom_call.1} parent=79 // pred_fallthru
          _
        // Predicated region
        $region85: #{tpu_custom_call.1} parent=79 // pred_check
          %p680 = pneg %p234
        $region86: #{tpu_custom_call.1} parent=79 // pred_check_branch
          %682 = sbr.rel (%p680) target = $region88
        $region87: #{tpu_custom_call.1} parent=79 // pred_region
          %s683 = sand.u32 %s33, 1
          %s684 = scalar_lea.sflag [#allocation12], %s683
          %s685 = sand.u32 %s219, 1
          %s686 = smul.addr %s685, 4
          %s687 = scalar_lea.vmem [#allocation11], %s686
          %688 = dma.done %s684, 64
        $region88: #{tpu_custom_call.1} parent=79 // pred_fallthru
          _
        // Predicated region
        $region89: #{tpu_custom_call.1} parent=79 // pred_check
          %p689 = pneg %p260
        $region90: #{tpu_custom_call.1} parent=79 // pred_check_branch
          %691 = sbr.rel (%p689) target = $region92
        $region91: #{tpu_custom_call.1} parent=79 // pred_region
          %s692 = sand.u32 %s33, 1
          %s693 = scalar_lea.sflag [#allocation12], %s692
          %s694 = sand.u32 %s245, 1
          %s695 = smul.addr %s694, 4
          %s696 = scalar_lea.vmem [#allocation13], %s695
          %697 = dma.done %s693, 64
        $region92: #{tpu_custom_call.1} parent=79 // pred_fallthru
          _
      $region80: #{tpu_custom_call.1} parent=5 // pred_fallthru
        _
    $region6: #{tpu_custom_call.1} parent=1 // loop_footer
      %s31 = sadd.s32 1, %s27
    $region7: #{tpu_custom_call.1} parent=1 // loop_footer_branch
      %26 = sbr.rel target = $region3
    $region8: #{tpu_custom_call.1} parent=1 // loop_exit
      _
    %698 = vsyncpa [#allocation3], 1
    %s699 = scalar_lea.sflag [#allocation3], 1
    %700 = vsyncpa %s699, 1
    %701 = vsyncpa [#allocation6], 1
    %702 = vsyncpa [#allocation9], 1
    %703 = vsyncpa [#allocation4], 1
    %s704 = scalar_lea.sflag [#allocation4], 1
    %705 = vsyncpa %s704, 1
    %706 = vsyncpa [#allocation12], 1
    %s707 = scalar_lea.sflag [#allocation12], 1
    %708 = vsyncpa %s707, 1

</llo_original>
